<compile_context>
chip_gen: v6e
topology: v6e:2x2x1
jax: 0.10.0
libtpu: 0.0.40
codegen_flags: <defaults>
</compile_context>

<pallas_src>
import jax
import jax.numpy as jnp
from jax.experimental import pallas as pl
from jax.experimental.pallas import tpu as pltpu

STATE_SIZE = 24            # BipedalWalker-v2 observation dim
H = (32, 16)               # hidden sizes h[0], h[1]
ACTION_SIZE = 4
LANES = 128                # padded feature width = one lane tile
BIAS_ROW = 120             # unused in_feature row carrying each layer's bias
                           # (multiple of 8 -> aligned view; > max real in_features)


def actor_kernel(state_ref, w_ref, out_ref):
    f32 = jnp.float32
    bf16 = jnp.bfloat16

    # Biases live in row BIAS_ROW of each layer's weight tile (free static views,
    # upcast to f32 so the whole epilogue stays f32).
    b1 = w_ref[0, BIAS_ROW:BIAS_ROW + 1, :].astype(f32)      # (1, LANES)
    b2 = w_ref[1, BIAS_ROW:BIAS_ROW + 1, :].astype(f32)
    b3 = w_ref[2, BIAS_ROW:BIAS_ROW + 1, :].astype(f32)

    # fc1 + relu.  Only the first STATE_SIZE rows of w_pack[0] are real weights,
    # so statically slice them (STATE_SIZE=24 is a multiple of 8 -> sublane
    # aligned view).  bf16 x bf16 on the MXU, f32 accumulate + f32 epilogue.
    x = state_ref[...].astype(bf16)                          # (B, STATE_SIZE)
    h = jnp.dot(x, w_ref[0, :STATE_SIZE, :],
                preferred_element_type=f32) + b1             # (B, LANES) f32
    h = jnp.maximum(h, 0.0)

    # fc2 + dropout + relu.  Eval-mode dropout is the identity.
    # Full K=128 contraction is safe: activation lanes >= H[0] (including lane
    # BIAS_ROW) are exactly 0, so padded/bias rows of w_pack[1] contribute 0.
    # TODO(synk): training-mode dropout (p=0.05) would need pltpu.prng_seed +
    #             pltpu.prng_random_bits; the eval forward is what is reproduced.
    h = jnp.dot(h.astype(bf16), w_ref[1], preferred_element_type=f32) + b2
    h = jnp.maximum(h, 0.0)                                  # (B, LANES) f32

    # fc3 + tanh on the full lane-dense vreg (single EUP launch), then store
    # only the real ACTION_SIZE columns (one cheap masked store at this size).
    y = jnp.tanh(jnp.dot(h.astype(bf16), w_ref[2], preferred_element_type=f32) + b3)
    out_ref[...] = y[:, :ACTION_SIZE]


def actor_forward(state, packed):
    """state: (B, STATE_SIZE) f32; packed: {'w': (3, LANES, LANES) bf16 slab}."""
    B = state.shape[0]
    Bp = ((B + 7) // 8) * 8                       # keep whole f32 sublane tiles
    x = state if Bp == B else jnp.pad(state, ((0, Bp - B), (0, 0)))
    vmem = pl.BlockSpec(memory_space=pltpu.MemorySpace.VMEM)
    out = pl.pallas_call(
        actor_kernel,
        out_shape=jax.ShapeDtypeStruct((Bp, ACTION_SIZE), jnp.float32),
        in_specs=[vmem, vmem],
        out_specs=vmem,
    )(x, packed["w"])
    return out if Bp == B else out[:B]


def init_params(key):
    """Raw Linear params stored as (in_features, out_features) so y = x @ W + b."""
    ks = jax.random.split(key, 6)
    s = 0.1
    return {
        "w1": s * jax.random.normal(ks[0], (STATE_SIZE, H[0]), jnp.float32),
        "b1": s * jax.random.normal(ks[1], (H[0],), jnp.float32),
        "w2": s * jax.random.normal(ks[2], (H[0], H[1]), jnp.float32),
        "b2": s * jax.random.normal(ks[3], (H[1],), jnp.float32),
        "w3": s * jax.random.normal(ks[4], (H[1], ACTION_SIZE), jnp.float32),
        "b3": s * jax.random.normal(ks[5], (ACTION_SIZE,), jnp.float32),
    }


def pack_params(p):
    """One-time packing of all weights AND biases into a single zero-padded,
    lane-dense bf16 slab: w[i, :in_i, :out_i] = W_i, w[i, BIAS_ROW, :out_i] = b_i."""
    assert max(STATE_SIZE, H[0], H[1]) <= BIAS_ROW < LANES
    w = jnp.zeros((3, LANES, LANES), jnp.float32)
    w = w.at[0, :STATE_SIZE, :H[0]].set(p["w1"])
    w = w.at[1, :H[0], :H[1]].set(p["w2"])
    w = w.at[2, :H[1], :ACTION_SIZE].set(p["w3"])
    w = w.at[0, BIAS_ROW, :H[0]].set(p["b1"])
    w = w.at[1, BIAS_ROW, :H[1]].set(p["b2"])
    w = w.at[2, BIAS_ROW, :ACTION_SIZE].set(p["b3"])
    return {"w": w.astype(jnp.bfloat16)}


def actor_reference(state, p):
    """Pure-JAX reference mirroring the PyTorch forward (eval mode)."""
    x = jax.nn.relu(state @ p["w1"] + p["b1"])
    x = jax.nn.relu(x @ p["w2"] + p["b2"])    # dropout is identity in eval mode
    return jnp.tanh(x @ p["w3"] + p["b3"])


if __name__ == "__main__":
    key = jax.random.PRNGKey(0)
    k_param, k_state = jax.random.split(key)

    B = 8
    params = init_params(k_param)
    packed = pack_params(params)
    state = jax.random.normal(k_state, (B, STATE_SIZE), jnp.float32)

    out = jax.block_until_ready(actor_forward(state, packed))
    assert out.shape == (B, ACTION_SIZE)

    # Tight check vs. a reference built from the same bf16-stored params
    # (kernel and reference then differ only by MXU / epilogue rounding).
    bf = lambda a: a.astype(jnp.bfloat16).astype(jnp.float32)
    params_q = {k: bf(v) for k, v in params.items()}
    ref_q = actor_reference(bf(state), params_q)
    assert jnp.allclose(out, ref_q, atol=2e-3, rtol=2e-3), \
        float(jnp.max(jnp.abs(out - ref_q)))

    # Loose sanity check vs. the full-f32 PyTorch-style reference (difference
    # is just bf16 weight/bias storage rounding).
    ref = actor_reference(state, params)
    assert jnp.allclose(out, ref, atol=2e-2, rtol=2e-2), \
        float(jnp.max(jnp.abs(out - ref)))

    print("KERNEL_OK")
</pallas_src>

<mosaic_0001>
module attributes {stable_mosaic.version = 11 : i64} {
  func.func @actor_kernel(%arg0: memref<8x24xf32, #tpu.memory_space<vmem>>, %arg1: memref<3x128x128xbf16, #tpu.memory_space<vmem>>, %arg2: memref<8x4xf32, #tpu.memory_space<vmem>>) attributes {dimension_semantics = [], scalar_prefetch = 0 : i64, scratch_operands = 0 : i64, tpu.core_type = #tpu.core_type<tc>} {
    %c0 = arith.constant 0 : index
    %c120 = arith.constant 120 : index
    %c0_0 = arith.constant 0 : index
    %0 = vector.load %arg1[%c0, %c120, %c0_0] : memref<3x128x128xbf16, #tpu.memory_space<vmem>>, vector<1x1x128xbf16>
    %1 = vector.shape_cast %0 : vector<1x1x128xbf16> to vector<1x128xbf16>
    %2 = arith.extf %1 : vector<1x128xbf16> to vector<1x128xf32>
    %c1 = arith.constant 1 : index
    %c120_1 = arith.constant 120 : index
    %c0_2 = arith.constant 0 : index
    %3 = vector.load %arg1[%c1, %c120_1, %c0_2] : memref<3x128x128xbf16, #tpu.memory_space<vmem>>, vector<1x1x128xbf16>
    %4 = vector.shape_cast %3 : vector<1x1x128xbf16> to vector<1x128xbf16>
    %5 = arith.extf %4 : vector<1x128xbf16> to vector<1x128xf32>
    %c2 = arith.constant 2 : index
    %c120_3 = arith.constant 120 : index
    %c0_4 = arith.constant 0 : index
    %6 = vector.load %arg1[%c2, %c120_3, %c0_4] : memref<3x128x128xbf16, #tpu.memory_space<vmem>>, vector<1x1x128xbf16>
    %7 = vector.shape_cast %6 : vector<1x1x128xbf16> to vector<1x128xbf16>
    %8 = arith.extf %7 : vector<1x128xbf16> to vector<1x128xf32>
    %c0_5 = arith.constant 0 : index
    %c0_6 = arith.constant 0 : index
    %9 = vector.load %arg0[%c0_5, %c0_6] : memref<8x24xf32, #tpu.memory_space<vmem>>, vector<8x24xf32>
    %10 = arith.truncf %9 : vector<8x24xf32> to vector<8x24xbf16>
    %c0_7 = arith.constant 0 : index
    %c0_8 = arith.constant 0 : index
    %c0_9 = arith.constant 0 : index
    %11 = vector.load %arg1[%c0_7, %c0_8, %c0_9] : memref<3x128x128xbf16, #tpu.memory_space<vmem>>, vector<1x24x128xbf16>
    %12 = vector.shape_cast %11 : vector<1x24x128xbf16> to vector<24x128xbf16>
    %cst = arith.constant dense<0.000000e+00> : vector<8x128xf32>
    %13 = tpu.matmul %10, %12, %cst {dimension_numbers = #tpu.dot_dimension_numbers<[1], [0], [0], [1], [0, 0, 1, 1], [], []>} : vector<8x24xbf16>, vector<24x128xbf16>, vector<8x128xf32> -> vector<8x128xf32>
    %14 = vector.broadcast %2 : vector<1x128xf32> to vector<8x128xf32>
    %15 = arith.addf %13, %14 : vector<8x128xf32>
    %cst_10 = arith.constant 0.000000e+00 : f32
    %16 = vector.broadcast %cst_10 : f32 to vector<8x128xf32>
    %17 = arith.maximumf %15, %16 : vector<8x128xf32>
    %18 = arith.truncf %17 : vector<8x128xf32> to vector<8x128xbf16>
    %c1_11 = arith.constant 1 : index
    %c0_12 = arith.constant 0 : index
    %c0_13 = arith.constant 0 : index
    %19 = vector.load %arg1[%c1_11, %c0_12, %c0_13] : memref<3x128x128xbf16, #tpu.memory_space<vmem>>, vector<1x128x128xbf16>
    %20 = vector.shape_cast %19 : vector<1x128x128xbf16> to vector<128x128xbf16>
    %cst_14 = arith.constant dense<0.000000e+00> : vector<8x128xf32>
    %21 = tpu.matmul %18, %20, %cst_14 {dimension_numbers = #tpu.dot_dimension_numbers<[1], [0], [0], [1], [0, 0, 1, 1], [], []>} : vector<8x128xbf16>, vector<128x128xbf16>, vector<8x128xf32> -> vector<8x128xf32>
    %22 = vector.broadcast %5 : vector<1x128xf32> to vector<8x128xf32>
    %23 = arith.addf %21, %22 : vector<8x128xf32>
    %cst_15 = arith.constant 0.000000e+00 : f32
    %24 = vector.broadcast %cst_15 : f32 to vector<8x128xf32>
    %25 = arith.maximumf %23, %24 : vector<8x128xf32>
    %26 = arith.truncf %25 : vector<8x128xf32> to vector<8x128xbf16>
    %c2_16 = arith.constant 2 : index
    %c0_17 = arith.constant 0 : index
    %c0_18 = arith.constant 0 : index
    %27 = vector.load %arg1[%c2_16, %c0_17, %c0_18] : memref<3x128x128xbf16, #tpu.memory_space<vmem>>, vector<1x128x128xbf16>
    %28 = vector.shape_cast %27 : vector<1x128x128xbf16> to vector<128x128xbf16>
    %cst_19 = arith.constant dense<0.000000e+00> : vector<8x128xf32>
    %29 = tpu.matmul %26, %28, %cst_19 {dimension_numbers = #tpu.dot_dimension_numbers<[1], [0], [0], [1], [0, 0, 1, 1], [], []>} : vector<8x128xbf16>, vector<128x128xbf16>, vector<8x128xf32> -> vector<8x128xf32>
    %30 = vector.broadcast %8 : vector<1x128xf32> to vector<8x128xf32>
    %31 = arith.addf %29, %30 : vector<8x128xf32>
    %32 = math.tanh %31 : vector<8x128xf32>
    %33 = vector.extract_strided_slice %32 {offsets = [0, 0], sizes = [8, 4], strides = [1, 1]} : vector<8x128xf32> to vector<8x4xf32>
    %c0_20 = arith.constant 0 : index
    %c0_21 = arith.constant 0 : index
    %34 = vector.load %arg2[%c0_20, %c0_21] : memref<8x4xf32, #tpu.memory_space<vmem>>, vector<8x4xf32>
    tpu.vector_store %arg2[%c0_20, %c0_21], %33 {strides = array<i32>} : memref<8x4xf32, #tpu.memory_space<vmem>>, vector<8x4xf32>,
    return
  }
}

</mosaic_0001>

<llo_original>
// kernel: tpu_custom_call.1
$region0: #{tpu_custom_call.1}
  #allocation0 [shape = 'u32[]', space=smem, size = 0x4, offset = 0x4, fixed_abs, tag = 'smem constant byte address 0x4 - core index']
  #allocation1 [shape = 'u32[144,128]{1,0:T(1,128)}', space=vmem, size = 0x12000, scoped, tag = 'internal scratch']
  %s0 = inlined_call_operand.hbm [shape: f32[8,24], index: 0, kind: input, shape index: {}]
  %s1 = inlined_call_operand.hbm [shape: bf16[3,128,128], index: 1, kind: input, shape index: {}]
  %s2 = inlined_call_operand.vmem [shape: f32[8,4], index: 2, kind: output, shape index: {}]
  %s3 = sld [smem:[#allocation0]]
  $region26: #{tpu_custom_call.1} parent=0
    _
  %s5 = ssub.s32 1, %s3
  %s6 = scalar_select 0, %s5, %s3
  $region1: #{tpu_custom_call.1} parent=0
    #allocation2 [shape = 'u8[4096]{0}', space=vmem, size = 0x1000, scoped, tag = 'input window, operand 0, single buffered']
    #allocation3 [shape = 's32[1]{0}', space=sflag, size = 0x4, scoped, tag = 'scoped memory for tpu_custom_call.1']
    #allocation4 [shape = 'u8[98304]{0}', space=vmem, size = 0x18000, scoped, tag = 'input window, operand 1, single buffered']
    #allocation5 [shape = 's32[1]{0}', space=sflag, size = 0x4, scoped, tag = 'scoped memory for tpu_custom_call.1']
    %7 = vsyncpa [#allocation3], 0
    %8 = vsyncpa [#allocation5], 0
    // Predicated region
    $region2: #{tpu_custom_call.1} parent=1 // pred_check
      _
    $region3: #{tpu_custom_call.1} parent=1 // pred_check_branch
      %10 = sbr.rel (0) target = $region5
    $region4: #{tpu_custom_call.1} parent=1 // pred_region
      %s12 = ssub.s32 128, 128
      %13 = vsyncadd [#allocation3], %s12
      %s15 = sshll.u32 [#allocation2], 4
      %s16 = int_to_ptr.vmem [resolvable:$true] %s15
      %18 = dma.hbm_to_vmem [thread:$0]  %s0, 128, %s16, [#allocation3]
    $region5: #{tpu_custom_call.1} parent=1 // pred_fallthru
      _
    // Predicated region
    $region6: #{tpu_custom_call.1} parent=1 // pred_check
      _
    $region7: #{tpu_custom_call.1} parent=1 // pred_check_branch
      %20 = sbr.rel (0) target = $region9
    $region8: #{tpu_custom_call.1} parent=1 // pred_region
      %s22 = ssub.s32 3072, 3072
      %23 = vsyncadd [#allocation5], %s22
      %s24 = sshll.u32 [#allocation4], 4
      %s25 = int_to_ptr.vmem [resolvable:$true] %s24
      %30 = dma.hbm_to_vmem [thread:$0]  %s1, 3072, %s25, [#allocation5], 64, 64, 4
    $region9: #{tpu_custom_call.1} parent=1 // pred_fallthru
      _
    // Predicated region
    $region10: #{tpu_custom_call.1} parent=1 // pred_check
      _
    $region11: #{tpu_custom_call.1} parent=1 // pred_check_branch
      %32 = sbr.rel (0) target = $region13
    $region12: #{tpu_custom_call.1} parent=1 // pred_region
      %33 = dma.done [#allocation3], 128
    $region13: #{tpu_custom_call.1} parent=1 // pred_fallthru
      _
    // Predicated region
    $region14: #{tpu_custom_call.1} parent=1 // pred_check
      _
    $region15: #{tpu_custom_call.1} parent=1 // pred_check_branch
      %35 = sbr.rel (0) target = $region17
    $region16: #{tpu_custom_call.1} parent=1 // pred_region
      %36 = dma.done [#allocation5], 3072
    $region17: #{tpu_custom_call.1} parent=1 // pred_fallthru
      _
    %v38 = vld [vmem:[#allocation4 + $0x3c] sm:$0x1]
    %v39 = vunpack.c.l.bf16 %v38
    %s40 = scalar_lea.vmem [#allocation4], 64
    %v41 = vld [vmem:[%s40 + $0x3c] sm:$0x1]
    %v42 = vunpack.c.l.bf16 %v41
    %s43 = scalar_lea.vmem [#allocation4], 128
    %v44 = vld [vmem:[%s43 + $0x3c] sm:$0x1]
    %v45 = vunpack.c.l.bf16 %v44
    %v46 = vld [vmem:[#allocation2] sm:$0xff]
    %v47 = vpack.c.bf16 %v46, %v46
    %v48 = vld [vmem:[#allocation4] sm:$0xf]
    %v49 = vld [vmem:[#allocation4 + $0x4] sm:$0xf]
    %v50 = vld [vmem:[#allocation4 + $0x8] sm:$0xf]
    %v51 = vlaneseq
    %v52 = vshrl.u32 %v51, 7
    %v53 = vsub.s32 0, %v52
    %v54 = vrot.slane %v39, %v53
    %v58 = vunpack.c.l.b16 %v48
    %v59 = vunpack.c.l.b16 %v49
    %v60 = vunpack.c.l.b16 %v50
    %v61 = vpack.c.b16 %v59, %v58
    %v62 = vpack.c.b16 %v60, %v60
    %vm64 = vcmask 195584
    %v66 = vsel %vm64, %v47, 0
    %vm68 = vcmask 1043456
    %v70 = vsel %vm68, %v62, 0
    %72 = vmatprep.subr.bf16.mxu0 0
    %73 = vmatpush1.bf16.msra.mxu0 0
    %74 = vmatprep.subr.bf16.mxu0 0
    %75 = vmatpush1.bf16.msra.mxu0 0
    %76 = vmatprep.subr.bf16.mxu0 0
    %77 = vmatpush1.bf16.msra.mxu0 0
    %78 = vmatprep.subr.bf16.mxu0 0
    %79 = vmatpush1.bf16.msra.mxu0 0
    %80 = vmatprep.subr.bf16.mxu0 0
    %81 = vmatpush1.bf16.msra.mxu0 0
    %82 = vmatprep.subr.bf16.mxu0 0
    %83 = vmatpush1.bf16.msra.mxu0 0
    %84 = vmatprep.subr.bf16.mxu0 0
    %85 = vmatpush1.bf16.msra.mxu0 %v70
    %86 = vmatprep.subr.bf16.mxu0 0
    %87 = vmatpush1.bf16.msra.mxu0 %v61
    %88 = vmatprep.subr.bf16.mxu0 0
    %89 = vmatpush2.bf16.msra.mxu0 0
    %90 = vmatprep.subr.bf16.mxu0 0
    %91 = vmatpush2.bf16.msra.mxu0 0
    %92 = vmatprep.subr.bf16.mxu0 0
    %93 = vmatpush2.bf16.msra.mxu0 0
    %94 = vmatprep.subr.bf16.mxu0 0
    %95 = vmatpush2.bf16.msra.mxu0 0
    %96 = vmatprep.subr.bf16.mxu0 0
    %97 = vmatpush2.bf16.msra.mxu0 0
    %98 = vmatprep.subr.bf16.mxu0 0
    %99 = vmatpush2.bf16.msra.mxu0 0
    %100 = vmatprep.subr.bf16.mxu0 0
    %101 = vmatpush2.bf16.msra.mxu0 0
    %102 = vmatprep.subr.bf16.mxu0 0
    %103 = vmatpush2.bf16.msra.mxu0 0
    %104 = vmatprep.mubr.bf16.mxu0 0
    %105 = vmatmul.mubr.bf16.gmra.mxu0 %v66
    %v106 = vpop.f32.mrf.mxu0
    %v107 = vadd.f32 %v54, %v106
    %v108 = vpop.f32.mrf.mxu0
    %v109 = vpop.f32.mrf.mxu0
    %v110 = vpop.f32.mrf.mxu0
    %111 = vdwg.mxu0
    %v112 = vmax.f32 %v107, 0.0
    %v113 = vpack.c.bf16 %v112, %v112
    %v114 = vld [vmem:[%s40] sm:$0xf]
    %v115 = vld [vmem:[%s40 + $0x4] sm:$0xf]
    %v116 = vld [vmem:[%s40 + $0x8] sm:$0xf]
    %v117 = vld [vmem:[%s40 + $0xc] sm:$0xf]
    %v118 = vld [vmem:[%s40 + $0x10] sm:$0xf]
    %v119 = vld [vmem:[%s40 + $0x14] sm:$0xf]
    %v120 = vld [vmem:[%s40 + $0x18] sm:$0xf]
    %v121 = vld [vmem:[%s40 + $0x1c] sm:$0xf]
    %v122 = vld [vmem:[%s40 + $0x20] sm:$0xf]
    %v123 = vld [vmem:[%s40 + $0x24] sm:$0xf]
    %v124 = vld [vmem:[%s40 + $0x28] sm:$0xf]
    %v125 = vld [vmem:[%s40 + $0x2c] sm:$0xf]
    %v126 = vld [vmem:[%s40 + $0x30] sm:$0xf]
    %v127 = vld [vmem:[%s40 + $0x34] sm:$0xf]
    %v128 = vld [vmem:[%s40 + $0x38] sm:$0xf]
    %v129 = vld [vmem:[%s40 + $0x3c] sm:$0xf]
    %v130 = vlaneseq
    %v131 = vshrl.u32 %v130, 7
    %v132 = vsub.s32 0, %v131
    %v133 = vrot.slane %v42, %v132
    %v150 = vunpack.c.l.b16 %v114
    %v151 = vunpack.c.l.b16 %v115
    %v152 = vunpack.c.l.b16 %v116
    %v153 = vunpack.c.l.b16 %v117
    %v154 = vunpack.c.l.b16 %v118
    %v155 = vunpack.c.l.b16 %v119
    %v156 = vunpack.c.l.b16 %v120
    %v157 = vunpack.c.l.b16 %v121
    %v158 = vunpack.c.l.b16 %v122
    %v159 = vunpack.c.l.b16 %v123
    %v160 = vunpack.c.l.b16 %v124
    %v161 = vunpack.c.l.b16 %v125
    %v162 = vunpack.c.l.b16 %v126
    %v163 = vunpack.c.l.b16 %v127
    %v164 = vunpack.c.l.b16 %v128
    %v165 = vunpack.c.l.b16 %v129
    %v166 = vpack.c.b16 %v151, %v150
    %v167 = vpack.c.b16 %v153, %v152
    %v168 = vpack.c.b16 %v155, %v154
    %v169 = vpack.c.b16 %v157, %v156
    %v170 = vpack.c.b16 %v159, %v158
    %v171 = vpack.c.b16 %v161, %v160
    %v172 = vpack.c.b16 %v163, %v162
    %v173 = vpack.c.b16 %v165, %v164
    %182 = vmatprep.subr.bf16.mxu0 0
    %183 = vmatpush1.bf16.msra.mxu0 %v173
    %184 = vmatprep.subr.bf16.mxu0 0
    %185 = vmatpush1.bf16.msra.mxu0 %v172
    %186 = vmatprep.subr.bf16.mxu0 0
    %187 = vmatpush1.bf16.msra.mxu0 %v171
    %188 = vmatprep.subr.bf16.mxu0 0
    %189 = vmatpush1.bf16.msra.mxu0 %v170
    %190 = vmatprep.subr.bf16.mxu0 0
    %191 = vmatpush1.bf16.msra.mxu0 %v169
    %192 = vmatprep.subr.bf16.mxu0 0
    %193 = vmatpush1.bf16.msra.mxu0 %v168
    %194 = vmatprep.subr.bf16.mxu0 0
    %195 = vmatpush1.bf16.msra.mxu0 %v167
    %196 = vmatprep.subr.bf16.mxu0 0
    %197 = vmatpush1.bf16.msra.mxu0 %v166
    %198 = vmatprep.subr.bf16.mxu0 0
    %199 = vmatpush2.bf16.msra.mxu0 0
    %200 = vmatprep.subr.bf16.mxu0 0
    %201 = vmatpush2.bf16.msra.mxu0 0
    %202 = vmatprep.subr.bf16.mxu0 0
    %203 = vmatpush2.bf16.msra.mxu0 0
    %204 = vmatprep.subr.bf16.mxu0 0
    %205 = vmatpush2.bf16.msra.mxu0 0
    %206 = vmatprep.subr.bf16.mxu0 0
    %207 = vmatpush2.bf16.msra.mxu0 0
    %208 = vmatprep.subr.bf16.mxu0 0
    %209 = vmatpush2.bf16.msra.mxu0 0
    %210 = vmatprep.subr.bf16.mxu0 0
    %211 = vmatpush2.bf16.msra.mxu0 0
    %212 = vmatprep.subr.bf16.mxu0 0
    %213 = vmatpush2.bf16.msra.mxu0 0
    %214 = vmatprep.mubr.bf16.mxu0 0
    %215 = vmatmul.mubr.bf16.gmra.mxu0 %v113
    %v216 = vpop.f32.mrf.mxu0
    %v217 = vadd.f32 %v133, %v216
    %v218 = vpop.f32.mrf.mxu0
    %v219 = vpop.f32.mrf.mxu0
    %v220 = vpop.f32.mrf.mxu0
    %221 = vdwg.mxu0
    %v222 = vmax.f32 %v217, 0.0
    %v223 = vpack.c.bf16 %v222, %v222
    %v224 = vld [vmem:[%s43] sm:$0xf]
    %v225 = vld [vmem:[%s43 + $0x4] sm:$0xf]
    %v226 = vld [vmem:[%s43 + $0x8] sm:$0xf]
    %v227 = vld [vmem:[%s43 + $0xc] sm:$0xf]
    %v228 = vld [vmem:[%s43 + $0x10] sm:$0xf]
    %v229 = vld [vmem:[%s43 + $0x14] sm:$0xf]
    %v230 = vld [vmem:[%s43 + $0x18] sm:$0xf]
    %v231 = vld [vmem:[%s43 + $0x1c] sm:$0xf]
    %v232 = vld [vmem:[%s43 + $0x20] sm:$0xf]
    %v233 = vld [vmem:[%s43 + $0x24] sm:$0xf]
    %v234 = vld [vmem:[%s43 + $0x28] sm:$0xf]
    %v235 = vld [vmem:[%s43 + $0x2c] sm:$0xf]
    %v236 = vld [vmem:[%s43 + $0x30] sm:$0xf]
    %v237 = vld [vmem:[%s43 + $0x34] sm:$0xf]
    %v238 = vld [vmem:[%s43 + $0x38] sm:$0xf]
    %v239 = vld [vmem:[%s43 + $0x3c] sm:$0xf]
    %v240 = vlaneseq
    %v241 = vshrl.u32 %v240, 7
    %v242 = vsub.s32 0, %v241
    %v243 = vrot.slane %v45, %v242
    %v260 = vunpack.c.l.b16 %v224
    %v261 = vunpack.c.l.b16 %v225
    %v262 = vunpack.c.l.b16 %v226
    %v263 = vunpack.c.l.b16 %v227
    %v264 = vunpack.c.l.b16 %v228
    %v265 = vunpack.c.l.b16 %v229
    %v266 = vunpack.c.l.b16 %v230
    %v267 = vunpack.c.l.b16 %v231
    %v268 = vunpack.c.l.b16 %v232
    %v269 = vunpack.c.l.b16 %v233
    %v270 = vunpack.c.l.b16 %v234
    %v271 = vunpack.c.l.b16 %v235
    %v272 = vunpack.c.l.b16 %v236
    %v273 = vunpack.c.l.b16 %v237
    %v274 = vunpack.c.l.b16 %v238
    %v275 = vunpack.c.l.b16 %v239
    %v276 = vpack.c.b16 %v261, %v260
    %v277 = vpack.c.b16 %v263, %v262
    %v278 = vpack.c.b16 %v265, %v264
    %v279 = vpack.c.b16 %v267, %v266
    %v280 = vpack.c.b16 %v269, %v268
    %v281 = vpack.c.b16 %v271, %v270
    %v282 = vpack.c.b16 %v273, %v272
    %v283 = vpack.c.b16 %v275, %v274
    %292 = vmatprep.subr.bf16.mxu0 0
    %293 = vmatpush1.bf16.msra.mxu0 %v283
    %294 = vmatprep.subr.bf16.mxu0 0
    %295 = vmatpush1.bf16.msra.mxu0 %v282
    %296 = vmatprep.subr.bf16.mxu0 0
    %297 = vmatpush1.bf16.msra.mxu0 %v281
    %298 = vmatprep.subr.bf16.mxu0 0
    %299 = vmatpush1.bf16.msra.mxu0 %v280
    %300 = vmatprep.subr.bf16.mxu0 0
    %301 = vmatpush1.bf16.msra.mxu0 %v279
    %302 = vmatprep.subr.bf16.mxu0 0
    %303 = vmatpush1.bf16.msra.mxu0 %v278
    %304 = vmatprep.subr.bf16.mxu0 0
    %305 = vmatpush1.bf16.msra.mxu0 %v277
    %306 = vmatprep.subr.bf16.mxu0 0
    %307 = vmatpush1.bf16.msra.mxu0 %v276
    %308 = vmatprep.subr.bf16.mxu0 0
    %309 = vmatpush2.bf16.msra.mxu0 0
    %310 = vmatprep.subr.bf16.mxu0 0
    %311 = vmatpush2.bf16.msra.mxu0 0
    %312 = vmatprep.subr.bf16.mxu0 0
    %313 = vmatpush2.bf16.msra.mxu0 0
    %314 = vmatprep.subr.bf16.mxu0 0
    %315 = vmatpush2.bf16.msra.mxu0 0
    %316 = vmatprep.subr.bf16.mxu0 0
    %317 = vmatpush2.bf16.msra.mxu0 0
    %318 = vmatprep.subr.bf16.mxu0 0
    %319 = vmatpush2.bf16.msra.mxu0 0
    %320 = vmatprep.subr.bf16.mxu0 0
    %321 = vmatpush2.bf16.msra.mxu0 0
    %322 = vmatprep.subr.bf16.mxu0 0
    %323 = vmatpush2.bf16.msra.mxu0 0
    %324 = vmatprep.mubr.bf16.mxu0 0
    %325 = vmatmul.mubr.bf16.gmra.mxu0 %v223
    %v326 = vpop.f32.mrf.mxu0
    %v327 = vadd.f32 %v243, %v326
    %v328 = vpop.f32.mrf.mxu0
    %v329 = vpop.f32.mrf.mxu0
    %v330 = vpop.f32.mrf.mxu0
    %331 = vdwg.mxu0
    %v332 = vtanh.pop %v327
    %vm333 = vcmask 31744
    %334 = vst.msk [vmem:[%s2] sm:$0xff] %vm333, %v332
    // Predicated region
    $region18: #{tpu_custom_call.1} parent=1 // pred_check
      _
    $region19: #{tpu_custom_call.1} parent=1 // pred_check_branch
      %336 = sbr.rel (0) target = $region21
    $region20: #{tpu_custom_call.1} parent=1 // pred_region
      _
    $region21: #{tpu_custom_call.1} parent=1 // pred_fallthru
      _
    // Predicated region
    $region22: #{tpu_custom_call.1} parent=1 // pred_check
      _
    $region23: #{tpu_custom_call.1} parent=1 // pred_check_branch
      %338 = sbr.rel (0) target = $region25
    $region24: #{tpu_custom_call.1} parent=1 // pred_region
      _
    $region25: #{tpu_custom_call.1} parent=1 // pred_fallthru
      _
    %339 = vsyncpa [#allocation3], 1
    %340 = vsyncpa [#allocation5], 1

</llo_original>
